<compile_context>
chip_gen: v6e
topology: v6e:2x2x1
jax: 0.10.0
libtpu: 0.0.40
codegen_flags: <defaults>
</compile_context>

<pallas_src>
import jax
import jax.numpy as jnp
from jax.experimental import pallas as pl
from jax.experimental.pallas import tpu as pltpu


# --------------------------------------------------------------------------
# Kernel: out[:, t] = x[:, t-1] if left_mask[t] else x[:, t+1] if right_mask[t]
#                     else x[:, t]
# --------------------------------------------------------------------------
def _jitter_kernel(x_ref, lmask_ref, rmask_ref, o_ref):
    x = x_ref[...]                                  # (TR, Tp)
    tp = x.shape[-1]
    # np.roll convention: roll(x, s)[t] = x[t - s]
    left = pltpu.roll(x, 1, 1)                      # left[:, t]  = x[:, t-1]
    right = pltpu.roll(x, tp - 1, 1)                # right[:, t] = x[:, t+1]
    lm = lmask_ref[...] > 0.5                       # (1, Tp) -> broadcast over rows
    rm = rmask_ref[...] > 0.5
    o_ref[...] = jnp.where(lm, left, jnp.where(rm, right, x))


def _jitter_select(x2, left_mask, right_mask):
    """x2: (R, Tp) with Tp % 128 == 0; masks: (1, Tp) float32 (0./1.)."""
    R, Tp = x2.shape
    itemsize = jnp.dtype(x2.dtype).itemsize
    # sublane alignment: 8 for f32, 16 for bf16, 32 for int8
    align = max(8, 32 // itemsize)

    if R % align == 0:
        budget_bytes = 1 << 20                      # ~1 MiB per block
        rows = max(align, (budget_bytes // (Tp * itemsize)) // align * align)
        tr = min(R, rows)
    else:
        tr = R                                      # full dim is always legal

    grid = (pl.cdiv(R, tr),)

    return pl.pallas_call(
        _jitter_kernel,
        out_shape=jax.ShapeDtypeStruct((R, Tp), x2.dtype),
        grid=grid,
        in_specs=[
            pl.BlockSpec((tr, Tp), lambda i: (i, 0)),
            pl.BlockSpec((1, Tp), lambda i: (0, 0)),
            pl.BlockSpec((1, Tp), lambda i: (0, 0)),
        ],
        out_specs=pl.BlockSpec((tr, Tp), lambda i: (i, 0)),
        compiler_params=pltpu.CompilerParams(
            dimension_semantics=("parallel",)
        ),
    )(x2, left_mask, right_mask)


# --------------------------------------------------------------------------
# Jitter sampling (plain JAX glue) + forward
# --------------------------------------------------------------------------
def sample_jitter_masks(key, length, probability):
    """Per-time-step jitter decisions, matching the PyTorch loop:
    replace ~ Bernoulli(p); interior tokens pick left/right uniformly;
    boundary tokens use their only neighbor (still with full prob p)."""
    k_rep, k_dir = jax.random.split(key)
    t = jnp.arange(length, dtype=jnp.int32)
    replace = jax.random.bernoulli(k_rep, probability, (length,))
    go_right = jax.random.bernoulli(k_dir, 0.5, (length,))
    use_right = replace & (go_right | (t == 0)) & (t != length - 1)
    use_left = replace & ((~go_right) | (t == length - 1)) & (t != 0)
    idx = jnp.where(use_right, t + 1, jnp.where(use_left, t - 1, t))
    return idx.astype(jnp.int32), use_left, use_right


def jitter_forward(quantized, key, probability=0.12, training=True):
    """Jitter forward pass. quantized: (B, C, T) (PyTorch NCW layout)."""
    if probability == 0.0 or not training:
        return quantized

    B, C, T = quantized.shape
    _, use_left, use_right = sample_jitter_masks(key, T, probability)

    # lane-pad T to a multiple of 128 (padded lanes are identity + sliced off)
    Tp = ((T + 127) // 128) * 128
    pad = Tp - T

    x2 = quantized.reshape(B * C, T)                # free reshape (leading dims)
    lm = use_left.astype(jnp.float32).reshape(1, T)
    rm = use_right.astype(jnp.float32).reshape(1, T)
    if pad:
        x2 = jnp.pad(x2, ((0, 0), (0, pad)))
        lm = jnp.pad(lm, ((0, 0), (0, pad)))
        rm = jnp.pad(rm, ((0, 0), (0, pad)))

    out2 = _jitter_select(x2, lm, rm)
    if pad:
        out2 = out2[:, :T]
    return out2.reshape(B, C, T)


if __name__ == "__main__":
    # Small shapes consistent with the module: quantized latents (B, C, T).
    B, C, T = 2, 4, 16
    probability = 0.12
    key = jax.random.PRNGKey(0)
    k_x, k_jit = jax.random.split(key)
    x = jax.random.normal(k_x, (B, C, T), dtype=jnp.float32)

    out = jitter_forward(x, k_jit, probability=probability, training=True)
    out = jax.block_until_ready(out)

    # Reference: out[:, :, t] = x[:, :, idx[t]] with the same deterministic draws.
    idx, _, _ = sample_jitter_masks(k_jit, T, probability)
    ref = x[:, :, idx]
    assert out.shape == x.shape
    assert jnp.allclose(out, ref), "Pallas jitter mismatch (padded-T path)"

    # Also exercise the 128-aligned (no-pad) path.
    B2, C2, T2 = 2, 8, 128
    k_x2, k_jit2 = jax.random.split(jax.random.PRNGKey(1))
    x2 = jax.random.normal(k_x2, (B2, C2, T2), dtype=jnp.float32)
    out2 = jax.block_until_ready(
        jitter_forward(x2, k_jit2, probability=probability, training=True)
    )
    idx2, _, _ = sample_jitter_masks(k_jit2, T2, probability)
    assert jnp.allclose(out2, x2[:, :, idx2]), "Pallas jitter mismatch (aligned-T path)"

    # eval mode / zero probability are identity and return the same type.
    out_eval = jitter_forward(x, k_jit, probability=probability, training=False)
    assert jnp.allclose(out_eval, x)
    out_p0 = jitter_forward(x, k_jit, probability=0.0, training=True)
    assert jnp.allclose(out_p0, x)

    print("KERNEL_OK")
</pallas_src>

<mosaic_0001>
module attributes {stable_mosaic.version = 11 : i64} {
  func.func @_jitter_kernel(%arg0: i32, %arg1: memref<8x128xf32, #tpu.memory_space<vmem>>, %arg2: memref<1x128xf32, #tpu.memory_space<vmem>>, %arg3: memref<1x128xf32, #tpu.memory_space<vmem>>, %arg4: memref<8x128xf32, #tpu.memory_space<vmem>>) attributes {dimension_semantics = [#tpu.dimension_semantics<parallel>], iteration_bounds = array<i64: 1>, scalar_prefetch = 0 : i64, scratch_operands = 0 : i64, tpu.core_type = #tpu.core_type<tc>, window_params = [{transform_indices = @transform_0, window_bounds = array<i64: 8, 128>}, {pipeline_mode = #tpu.pipeline_mode<synchronous>, transform_indices = @transform_1, window_bounds = array<i64: 1, 128>}, {pipeline_mode = #tpu.pipeline_mode<synchronous>, transform_indices = @transform_2, window_bounds = array<i64: 1, 128>}, {transform_indices = @transform_3, window_bounds = array<i64: 8, 128>}]} {
    %c0 = arith.constant 0 : index
    %c0_0 = arith.constant 0 : index
    %0 = vector.load %arg1[%c0, %c0_0] : memref<8x128xf32, #tpu.memory_space<vmem>>, vector<8x128xf32>
    %c1_i32 = arith.constant 1 : i32
    %1 = tpu.dynamic_rotate %0 by %c1_i32 dim 1 : vector<8x128xf32>, i32 -> vector<8x128xf32>
    %c127_i32 = arith.constant 127 : i32
    %2 = tpu.dynamic_rotate %0 by %c127_i32 dim 1 : vector<8x128xf32>, i32 -> vector<8x128xf32>
    %c0_1 = arith.constant 0 : index
    %c0_2 = arith.constant 0 : index
    %3 = vector.load %arg2[%c0_1, %c0_2] : memref<1x128xf32, #tpu.memory_space<vmem>>, vector<1x128xf32>
    %cst = arith.constant 5.000000e-01 : f32
    %4 = vector.broadcast %cst : f32 to vector<1x128xf32>
    %5 = arith.cmpf ogt, %3, %4 : vector<1x128xf32>
    %c0_3 = arith.constant 0 : index
    %c0_4 = arith.constant 0 : index
    %6 = vector.load %arg3[%c0_3, %c0_4] : memref<1x128xf32, #tpu.memory_space<vmem>>, vector<1x128xf32>
    %cst_5 = arith.constant 5.000000e-01 : f32
    %7 = vector.broadcast %cst_5 : f32 to vector<1x128xf32>
    %8 = arith.cmpf ogt, %6, %7 : vector<1x128xf32>
    %9 = vector.shape_cast %8 : vector<1x128xi1> to vector<1x128xi1>
    %10 = vector.broadcast %9 : vector<1x128xi1> to vector<8x128xi1>
    %11 = arith.select %10, %2, %0 : vector<8x128xi1>, vector<8x128xf32>
    %12 = vector.shape_cast %5 : vector<1x128xi1> to vector<1x128xi1>
    %13 = vector.broadcast %12 : vector<1x128xi1> to vector<8x128xi1>
    %14 = arith.select %13, %1, %11 : vector<8x128xi1>, vector<8x128xf32>
    %c0_6 = arith.constant 0 : index
    %c0_7 = arith.constant 0 : index
    %15 = vector.load %arg4[%c0_6, %c0_7] : memref<8x128xf32, #tpu.memory_space<vmem>>, vector<8x128xf32>
    tpu.vector_store %arg4[%c0_6, %c0_7], %14 {strides = array<i32>} : memref<8x128xf32, #tpu.memory_space<vmem>>, vector<8x128xf32>,
    return
  }
  func.func @transform_0(%arg0: i32) -> (i32, i32) {
    %c0_i32 = arith.constant 0 : i32
    %c0_i32_0 = arith.constant 0 : i32
    return %arg0, %c0_i32 : i32, i32
  }
  func.func @transform_1(%arg0: i32) -> (i32, i32) {
    %c0_i32 = arith.constant 0 : i32
    %c0_i32_0 = arith.constant 0 : i32
    %c0_i32_1 = arith.constant 0 : i32
    return %c0_i32, %c0_i32_0 : i32, i32
  }
  func.func @transform_2(%arg0: i32) -> (i32, i32) {
    %c0_i32 = arith.constant 0 : i32
    %c0_i32_0 = arith.constant 0 : i32
    %c0_i32_1 = arith.constant 0 : i32
    return %c0_i32, %c0_i32_0 : i32, i32
  }
  func.func @transform_3(%arg0: i32) -> (i32, i32) {
    %c0_i32 = arith.constant 0 : i32
    %c0_i32_0 = arith.constant 0 : i32
    return %arg0, %c0_i32 : i32, i32
  }
}

</mosaic_0001>

<llo_original>
// kernel: tpu_custom_call.1
$region0: #{tpu_custom_call.1}
  #allocation0 [shape = 'u32[]', space=smem, size = 0x4, offset = 0x4, fixed_abs, tag = 'smem constant byte address 0x4 - core index']
  #allocation1 [shape = 'u32[144,128]{1,0:T(1,128)}', space=vmem, size = 0x12000, scoped, tag = 'internal scratch']
  %s0 = inlined_call_operand.hbm [shape: f32[8,128], index: 0, kind: input, shape index: {}]
  %s1 = inlined_call_operand.vmem [shape: f32[1,128], index: 1, kind: input, shape index: {}]
  %s2 = inlined_call_operand.vmem [shape: f32[1,128], index: 2, kind: input, shape index: {}]
  %s3 = inlined_call_operand.hbm [shape: f32[8,128], index: 3, kind: output, shape index: {}]
  %s4 = sld [smem:[#allocation0]]
  $region26: #{tpu_custom_call.1} parent=0
    _
  %s6 = ssub.s32 1, %s4
  %s7 = scalar_select 0, %s6, %s4
  $region1: #{tpu_custom_call.1} parent=0
    #allocation2 [shape = 'u8[4096]{0}', space=vmem, size = 0x1000, scoped, tag = 'input window, operand 0, single buffered']
    #allocation3 [shape = 's32[1]{0}', space=sflag, size = 0x4, scoped, tag = 'scoped memory for tpu_custom_call.1']
    #allocation4 [shape = 's32[1]{0}', space=sflag, size = 0x4, scoped, tag = 'scoped memory for tpu_custom_call.1']
    #allocation5 [shape = 'u8[4096]{0}', space=vmem, size = 0x1000, scoped, tag = 'output window, operand 0, single buffered']
    %8 = vsyncpa [#allocation3], 0
    %9 = vsyncpa [#allocation4], 0
    // Predicated region
    $region2: #{tpu_custom_call.1} parent=1 // pred_check
      _
    $region3: #{tpu_custom_call.1} parent=1 // pred_check_branch
      %11 = sbr.rel (0) target = $region5
    $region4: #{tpu_custom_call.1} parent=1 // pred_region
      %s13 = ssub.s32 128, 128
      %14 = vsyncadd [#allocation3], %s13
      %s16 = sshll.u32 [#allocation2], 4
      %s17 = int_to_ptr.vmem [resolvable:$true] %s16
      %19 = dma.hbm_to_vmem [thread:$0]  %s0, 128, %s17, [#allocation3]
    $region5: #{tpu_custom_call.1} parent=1 // pred_fallthru
      _
    // Predicated region
    $region6: #{tpu_custom_call.1} parent=1 // pred_check
      _
    $region7: #{tpu_custom_call.1} parent=1 // pred_check_branch
      %21 = sbr.rel (0) target = $region9
    $region8: #{tpu_custom_call.1} parent=1 // pred_region
      _
    $region9: #{tpu_custom_call.1} parent=1 // pred_fallthru
      _
    // Predicated region
    $region10: #{tpu_custom_call.1} parent=1 // pred_check
      _
    $region11: #{tpu_custom_call.1} parent=1 // pred_check_branch
      %23 = sbr.rel (0) target = $region13
    $region12: #{tpu_custom_call.1} parent=1 // pred_region
      _
    $region13: #{tpu_custom_call.1} parent=1 // pred_fallthru
      _
    // Predicated region
    $region14: #{tpu_custom_call.1} parent=1 // pred_check
      _
    $region15: #{tpu_custom_call.1} parent=1 // pred_check_branch
      %25 = sbr.rel (0) target = $region17
    $region16: #{tpu_custom_call.1} parent=1 // pred_region
      %26 = dma.done [#allocation3], 128
    $region17: #{tpu_custom_call.1} parent=1 // pred_fallthru
      _
    %v27 = vld [vmem:[#allocation2] sm:$0xff]
    %28 = vrot.lane.b32.xlu0 %v27, 1
    %v29 = vpop.permute.xlu0 %28
    %30 = vrot.lane.b32.xlu0 %v27, 127
    %v31 = vpop.permute.xlu0 %30
    %v32 = vld [vmem:[%s1] sm:$0x1]
    %vm33 = vcmp.gt.f32.partialorder %v32, 0.5
    %v34 = vld [vmem:[%s2] sm:$0x1]
    %vm35 = vcmp.gt.f32.partialorder %v34, 0.5
    %v36 = vsel %vm35, 1, 0
    %v37 = vlaneseq
    %v38 = vshrl.u32 %v37, 7
    %v39 = vsub.s32 0, %v38
    %v40 = vrot.slane %v36, %v39
    %vm41 = vcmp.eq.s32.totalorder %v40, 1
    %v42 = vsel %vm41, %v31, %v27
    %v43 = vsel %vm33, 1, 0
    %v44 = vlaneseq
    %v45 = vshrl.u32 %v44, 7
    %v46 = vsub.s32 0, %v45
    %v47 = vrot.slane %v43, %v46
    %vm48 = vcmp.eq.s32.totalorder %v47, 1
    %v49 = vsel %vm48, %v29, %v42
    %50 = vst [vmem:[#allocation5] sm:$0xff] %v49
    // Predicated region
    $region18: #{tpu_custom_call.1} parent=1 // pred_check
      _
    $region19: #{tpu_custom_call.1} parent=1 // pred_check_branch
      %52 = sbr.rel (0) target = $region21
    $region20: #{tpu_custom_call.1} parent=1 // pred_region
      %s54 = ssub.s32 128, 128
      %55 = vsyncadd [#allocation4], %s54
      %s57 = sshll.u32 [#allocation5], 4
      %s58 = int_to_ptr.vmem [resolvable:$true] %s57
      %60 = dma.vmem_to_hbm [thread:$0]  %s58, 128, %s3, [#allocation4]
    $region21: #{tpu_custom_call.1} parent=1 // pred_fallthru
      _
    // Predicated region
    $region22: #{tpu_custom_call.1} parent=1 // pred_check
      _
    $region23: #{tpu_custom_call.1} parent=1 // pred_check_branch
      %62 = sbr.rel (0) target = $region25
    $region24: #{tpu_custom_call.1} parent=1 // pred_region
      %63 = dma.done [#allocation4], 128
    $region25: #{tpu_custom_call.1} parent=1 // pred_fallthru
      _
    %64 = vsyncpa [#allocation3], 1
    %65 = vsyncpa [#allocation4], 1

</llo_original>
